<compile_context>
chip_gen: v5e
topology: v5e:2x2
jax: 0.10.0
libtpu: 0.0.40
codegen_flags: <defaults>
</compile_context>

<pallas_src>
import jax
import jax.numpy as jnp
from jax.experimental import pallas as pl
from jax.experimental.pallas import tpu as pltpu


def _round_up(x, m):
    return ((x + m - 1) // m) * m


def _pad2(a, rows, cols):
    r, c = a.shape
    return jnp.pad(a, ((0, rows - r), (0, cols - c)))


# ----------------------------------------------------------------------------
# Kernel: one batch tile through all three Linear(+ReLU) layers.
# ----------------------------------------------------------------------------
def _mapping_kernel(x_ref, w1_ref, b1_ref, w2_ref, b2_ref, w3_ref, b3_ref, o_ref):
    # x arrives f32 at native z_dim; cast to bf16 in-register for the MXU.
    x = x_ref[...].astype(jnp.bfloat16)

    h1 = jnp.dot(x, w1_ref[...], preferred_element_type=jnp.float32) + b1_ref[...]
    h1 = jnp.maximum(h1, 0.0).astype(jnp.bfloat16)

    h2 = jnp.dot(h1, w2_ref[...], preferred_element_type=jnp.float32) + b2_ref[...]
    h2 = jnp.maximum(h2, 0.0).astype(jnp.bfloat16)

    out = jnp.dot(h2, w3_ref[...], preferred_element_type=jnp.float32) + b3_ref[...]
    o_ref[...] = out.astype(o_ref.dtype)


# ----------------------------------------------------------------------------
# One-time parameter preparation (pad hidden dim to 128, cast weights to bf16).
# Zero padding is exact: padded hidden columns get zero bias, stay zero through
# ReLU, and hit zero-padded rows of the next weight.
# ----------------------------------------------------------------------------
def prepare_mapping_params(params):
    w1, b1, w2, b2, w3, b3 = params
    z_dim, hidden_dim = w1.shape
    w_dim = w3.shape[1]
    h_p = _round_up(hidden_dim, 128)

    w1_p = _pad2(w1, z_dim, h_p).astype(jnp.bfloat16)
    b1_p = _pad2(b1, 1, h_p).astype(jnp.float32)
    w2_p = _pad2(w2, h_p, h_p).astype(jnp.bfloat16)
    b2_p = _pad2(b2, 1, h_p).astype(jnp.float32)
    w3_p = _pad2(w3, h_p, w_dim).astype(jnp.bfloat16)
    b3_p = b3.astype(jnp.float32)
    return (w1_p, b1_p, w2_p, b2_p, w3_p, b3_p)


def _choose_block_batch(B, requested):
    # Multiple of 16 (bf16 sublane pair), floor 16, cap 2048 (v7x VMEM budget).
    requested = max(16, min(_round_up(requested, 16), 2048))
    # Shape the grid for >= 2 steps when possible so ("parallel",) can split
    # the batch across v7x's two TensorCores.
    two_step = _round_up(pl.cdiv(B, 2), 16)
    bb = min(requested, two_step)
    if B <= bb:
        # Single full block: no padding, no masked partial block.
        bb = B
    return bb


# ----------------------------------------------------------------------------
# Forward pass.
# ----------------------------------------------------------------------------
def mapping_layers_forward(noise, prepared_params, *, block_batch=1024):
    """noise: (B, z_dim).  prepared_params: output of prepare_mapping_params."""
    w1_p, b1_p, w2_p, b2_p, w3_p, b3_p = prepared_params
    B, z_dim = noise.shape
    h_p = w1_p.shape[1]
    w_dim = w3_p.shape[1]

    bb = _choose_block_batch(B, block_batch)
    grid = (pl.cdiv(B, bb),)

    x_map = lambda i: (i, 0)      # batch-tiled
    rep_map = lambda i: (0, 0)    # constant block: fetched once

    return pl.pallas_call(
        _mapping_kernel,
        out_shape=jax.ShapeDtypeStruct((B, w_dim), noise.dtype),
        grid_spec=pltpu.PrefetchScalarGridSpec(
            num_scalar_prefetch=0,
            grid=grid,
            in_specs=[
                pl.BlockSpec((bb, z_dim), x_map),     # x  (native z_dim = full dim)
                pl.BlockSpec((z_dim, h_p), rep_map),  # w1
                pl.BlockSpec((1, h_p), rep_map),      # b1
                pl.BlockSpec((h_p, h_p), rep_map),    # w2
                pl.BlockSpec((1, h_p), rep_map),      # b2
                pl.BlockSpec((h_p, w_dim), rep_map),  # w3 (native w_dim = full dim)
                pl.BlockSpec((1, w_dim), rep_map),    # b3
            ],
            out_specs=pl.BlockSpec((bb, w_dim), x_map),
        ),
        compiler_params=pltpu.CompilerParams(
            dimension_semantics=("parallel",),
        ),
    )(noise, w1_p, b1_p, w2_p, b2_p, w3_p, b3_p)


# ----------------------------------------------------------------------------
# Init + pure-JAX reference (PyTorch nn.Linear semantics: x @ W^T + b, stored
# here with weights already transposed to (in, out) and biases as (1, out)).
# ----------------------------------------------------------------------------
def init_mapping_params(key, z_dim, hidden_dim, w_dim, dtype=jnp.float32):
    ks = jax.random.split(key, 6)

    def linear(kw, kb, fan_in, fan_out):
        bound = 1.0 / jnp.sqrt(fan_in)
        w = jax.random.uniform(kw, (fan_in, fan_out), dtype, -bound, bound)
        b = jax.random.uniform(kb, (1, fan_out), dtype, -bound, bound)
        return w, b

    w1, b1 = linear(ks[0], ks[1], z_dim, hidden_dim)
    w2, b2 = linear(ks[2], ks[3], hidden_dim, hidden_dim)
    w3, b3 = linear(ks[4], ks[5], hidden_dim, w_dim)
    return (w1, b1, w2, b2, w3, b3)


def mapping_layers_ref(noise, params):
    w1, b1, w2, b2, w3, b3 = params
    h = jnp.maximum(noise @ w1 + b1, 0.0)
    h = jnp.maximum(h @ w2 + b2, 0.0)
    return h @ w3 + b3


if __name__ == "__main__":
    z_dim, hidden_dim, w_dim = 32, 64, 32

    key = jax.random.PRNGKey(0)
    k_params, k_noise1, k_noise2 = jax.random.split(key, 3)
    params = init_mapping_params(k_params, z_dim, hidden_dim, w_dim)
    prepared = prepare_mapping_params(params)

    # Case 1: tiny batch -> single full block, no padding anywhere.
    batch = 8
    noise = jax.random.normal(k_noise1, (batch, z_dim), dtype=jnp.float32)
    out = jax.block_until_ready(mapping_layers_forward(noise, prepared))
    ref = mapping_layers_ref(noise, params)
    assert out.shape == (batch, w_dim), out.shape
    # bf16 MXU operands with f32 accumulation vs. pure-f32 reference.
    assert jnp.allclose(out, ref, atol=5e-2, rtol=5e-2), (
        "mismatch vs reference (small batch)")

    # Case 2: non-divisible batch -> 2-step grid with a partial last block.
    batch2 = 300
    noise2 = jax.random.normal(k_noise2, (batch2, z_dim), dtype=jnp.float32)
    out2 = jax.block_until_ready(mapping_layers_forward(noise2, prepared))
    ref2 = mapping_layers_ref(noise2, params)
    assert out2.shape == (batch2, w_dim), out2.shape
    assert jnp.allclose(out2, ref2, atol=5e-2, rtol=5e-2), (
        "mismatch vs reference (multi-tile batch)")

    print("KERNEL_OK")
</pallas_src>

<mosaic_0001>
module attributes {stable_mosaic.version = 11 : i64} {
  func.func @_mapping_kernel(%arg0: i32, %arg1: memref<8x32xf32, #tpu.memory_space<vmem>>, %arg2: memref<32x128xbf16, #tpu.memory_space<vmem>>, %arg3: memref<1x128xf32, #tpu.memory_space<vmem>>, %arg4: memref<128x128xbf16, #tpu.memory_space<vmem>>, %arg5: memref<1x128xf32, #tpu.memory_space<vmem>>, %arg6: memref<128x32xbf16, #tpu.memory_space<vmem>>, %arg7: memref<1x32xf32, #tpu.memory_space<vmem>>, %arg8: memref<8x32xf32, #tpu.memory_space<vmem>>) attributes {dimension_semantics = [#tpu.dimension_semantics<parallel>], iteration_bounds = array<i64: 1>, scalar_prefetch = 0 : i64, scratch_operands = 0 : i64, tpu.core_type = #tpu.core_type<tc>, window_params = [{transform_indices = @transform_0, window_bounds = array<i64: 8, 32>}, {pipeline_mode = #tpu.pipeline_mode<synchronous>, transform_indices = @transform_1, window_bounds = array<i64: 32, 128>}, {pipeline_mode = #tpu.pipeline_mode<synchronous>, transform_indices = @transform_2, window_bounds = array<i64: 1, 128>}, {pipeline_mode = #tpu.pipeline_mode<synchronous>, transform_indices = @transform_3, window_bounds = array<i64: 128, 128>}, {pipeline_mode = #tpu.pipeline_mode<synchronous>, transform_indices = @transform_4, window_bounds = array<i64: 1, 128>}, {pipeline_mode = #tpu.pipeline_mode<synchronous>, transform_indices = @transform_5, window_bounds = array<i64: 128, 32>}, {pipeline_mode = #tpu.pipeline_mode<synchronous>, transform_indices = @transform_6, window_bounds = array<i64: 1, 32>}, {transform_indices = @transform_7, window_bounds = array<i64: 8, 32>}]} {
    %c0 = arith.constant 0 : index
    %c0_0 = arith.constant 0 : index
    %0 = vector.load %arg1[%c0, %c0_0] : memref<8x32xf32, #tpu.memory_space<vmem>>, vector<8x32xf32>
    %1 = arith.truncf %0 : vector<8x32xf32> to vector<8x32xbf16>
    %c0_1 = arith.constant 0 : index
    %c0_2 = arith.constant 0 : index
    %2 = vector.load %arg2[%c0_1, %c0_2] : memref<32x128xbf16, #tpu.memory_space<vmem>>, vector<32x128xbf16>
    %cst = arith.constant dense<0.000000e+00> : vector<8x128xf32>
    %3 = tpu.matmul %1, %2, %cst {dimension_numbers = #tpu.dot_dimension_numbers<[1], [0], [0], [1], [0, 0, 1, 1], [], []>} : vector<8x32xbf16>, vector<32x128xbf16>, vector<8x128xf32> -> vector<8x128xf32>
    %c0_3 = arith.constant 0 : index
    %c0_4 = arith.constant 0 : index
    %4 = vector.load %arg3[%c0_3, %c0_4] : memref<1x128xf32, #tpu.memory_space<vmem>>, vector<1x128xf32>
    %5 = vector.broadcast %4 : vector<1x128xf32> to vector<8x128xf32>
    %6 = arith.addf %3, %5 : vector<8x128xf32>
    %cst_5 = arith.constant 0.000000e+00 : f32
    %7 = vector.broadcast %cst_5 : f32 to vector<8x128xf32>
    %8 = arith.maximumf %6, %7 : vector<8x128xf32>
    %9 = arith.truncf %8 : vector<8x128xf32> to vector<8x128xbf16>
    %c0_6 = arith.constant 0 : index
    %c0_7 = arith.constant 0 : index
    %10 = vector.load %arg4[%c0_6, %c0_7] : memref<128x128xbf16, #tpu.memory_space<vmem>>, vector<128x128xbf16>
    %cst_8 = arith.constant dense<0.000000e+00> : vector<8x128xf32>
    %11 = tpu.matmul %9, %10, %cst_8 {dimension_numbers = #tpu.dot_dimension_numbers<[1], [0], [0], [1], [0, 0, 1, 1], [], []>} : vector<8x128xbf16>, vector<128x128xbf16>, vector<8x128xf32> -> vector<8x128xf32>
    %c0_9 = arith.constant 0 : index
    %c0_10 = arith.constant 0 : index
    %12 = vector.load %arg5[%c0_9, %c0_10] : memref<1x128xf32, #tpu.memory_space<vmem>>, vector<1x128xf32>
    %13 = vector.broadcast %12 : vector<1x128xf32> to vector<8x128xf32>
    %14 = arith.addf %11, %13 : vector<8x128xf32>
    %cst_11 = arith.constant 0.000000e+00 : f32
    %15 = vector.broadcast %cst_11 : f32 to vector<8x128xf32>
    %16 = arith.maximumf %14, %15 : vector<8x128xf32>
    %17 = arith.truncf %16 : vector<8x128xf32> to vector<8x128xbf16>
    %c0_12 = arith.constant 0 : index
    %c0_13 = arith.constant 0 : index
    %18 = vector.load %arg6[%c0_12, %c0_13] : memref<128x32xbf16, #tpu.memory_space<vmem>>, vector<128x32xbf16>
    %cst_14 = arith.constant dense<0.000000e+00> : vector<8x32xf32>
    %19 = tpu.matmul %17, %18, %cst_14 {dimension_numbers = #tpu.dot_dimension_numbers<[1], [0], [0], [1], [0, 0, 1, 1], [], []>} : vector<8x128xbf16>, vector<128x32xbf16>, vector<8x32xf32> -> vector<8x32xf32>
    %c0_15 = arith.constant 0 : index
    %c0_16 = arith.constant 0 : index
    %20 = vector.load %arg7[%c0_15, %c0_16] : memref<1x32xf32, #tpu.memory_space<vmem>>, vector<1x32xf32>
    %21 = vector.broadcast %20 : vector<1x32xf32> to vector<8x32xf32>
    %22 = arith.addf %19, %21 : vector<8x32xf32>
    %c0_17 = arith.constant 0 : index
    %c0_18 = arith.constant 0 : index
    %23 = vector.load %arg8[%c0_17, %c0_18] : memref<8x32xf32, #tpu.memory_space<vmem>>, vector<8x32xf32>
    tpu.vector_store %arg8[%c0_17, %c0_18], %22 {strides = array<i32>} : memref<8x32xf32, #tpu.memory_space<vmem>>, vector<8x32xf32>,
    return
  }
  func.func @transform_0(%arg0: i32) -> (i32, i32) {
    %c0_i32 = arith.constant 0 : i32
    %c0_i32_0 = arith.constant 0 : i32
    return %arg0, %c0_i32 : i32, i32
  }
  func.func @transform_1(%arg0: i32) -> (i32, i32) {
    %c0_i32 = arith.constant 0 : i32
    %c0_i32_0 = arith.constant 0 : i32
    %c0_i32_1 = arith.constant 0 : i32
    return %c0_i32, %c0_i32_0 : i32, i32
  }
  func.func @transform_2(%arg0: i32) -> (i32, i32) {
    %c0_i32 = arith.constant 0 : i32
    %c0_i32_0 = arith.constant 0 : i32
    %c0_i32_1 = arith.constant 0 : i32
    return %c0_i32, %c0_i32_0 : i32, i32
  }
  func.func @transform_3(%arg0: i32) -> (i32, i32) {
    %c0_i32 = arith.constant 0 : i32
    %c0_i32_0 = arith.constant 0 : i32
    %c0_i32_1 = arith.constant 0 : i32
    return %c0_i32, %c0_i32_0 : i32, i32
  }
  func.func @transform_4(%arg0: i32) -> (i32, i32) {
    %c0_i32 = arith.constant 0 : i32
    %c0_i32_0 = arith.constant 0 : i32
    %c0_i32_1 = arith.constant 0 : i32
    return %c0_i32, %c0_i32_0 : i32, i32
  }
  func.func @transform_5(%arg0: i32) -> (i32, i32) {
    %c0_i32 = arith.constant 0 : i32
    %c0_i32_0 = arith.constant 0 : i32
    %c0_i32_1 = arith.constant 0 : i32
    return %c0_i32, %c0_i32_0 : i32, i32
  }
  func.func @transform_6(%arg0: i32) -> (i32, i32) {
    %c0_i32 = arith.constant 0 : i32
    %c0_i32_0 = arith.constant 0 : i32
    %c0_i32_1 = arith.constant 0 : i32
    return %c0_i32, %c0_i32_0 : i32, i32
  }
  func.func @transform_7(%arg0: i32) -> (i32, i32) {
    %c0_i32 = arith.constant 0 : i32
    %c0_i32_0 = arith.constant 0 : i32
    return %arg0, %c0_i32 : i32, i32
  }
}

</mosaic_0001>

<llo_original>
// kernel: tpu_custom_call.1
$region0: #{tpu_custom_call.1}
  #allocation0 [shape = 'u32[]', space=smem, size = 0x4, offset = 0x4, fixed_abs, tag = 'smem constant byte address 0x4 - core index']
  #allocation1 [shape = 'u32[72,128]{1,0:T(1,128)}', space=vmem, size = 0x9000, scoped, tag = 'internal scratch']
  %s0 = inlined_call_operand.hbm [shape: f32[8,32], index: 0, kind: input, shape index: {}]
  %s1 = inlined_call_operand.vmem [shape: bf16[32,128], index: 1, kind: input, shape index: {}]
  %s2 = inlined_call_operand.vmem [shape: f32[1,128], index: 2, kind: input, shape index: {}]
  %s3 = inlined_call_operand.vmem [shape: bf16[128,128], index: 3, kind: input, shape index: {}]
  %s4 = inlined_call_operand.vmem [shape: f32[1,128], index: 4, kind: input, shape index: {}]
  %s5 = inlined_call_operand.vmem [shape: bf16[128,32], index: 5, kind: input, shape index: {}]
  %s6 = inlined_call_operand.vmem [shape: f32[1,32], index: 6, kind: input, shape index: {}]
  %s7 = inlined_call_operand.hbm [shape: f32[8,32], index: 7, kind: output, shape index: {}]
  %s8 = sld [smem:[#allocation0]]
  $region42: #{tpu_custom_call.1} parent=0
    _
  %s10 = ssub.s32 1, %s8
  %s11 = scalar_select 0, %s10, %s8
  $region1: #{tpu_custom_call.1} parent=0
    #allocation2 [shape = 'u8[4096]{0}', space=vmem, size = 0x1000, scoped, tag = 'input window, operand 0, single buffered']
    #allocation3 [shape = 's32[1]{0}', space=sflag, size = 0x4, scoped, tag = 'scoped memory for tpu_custom_call.1']
    #allocation4 [shape = 's32[1]{0}', space=sflag, size = 0x4, scoped, tag = 'scoped memory for tpu_custom_call.1']
    #allocation5 [shape = 'u8[4096]{0}', space=vmem, size = 0x1000, scoped, tag = 'output window, operand 0, single buffered']
    %12 = vsyncpa [#allocation3], 0
    %13 = vsyncpa [#allocation4], 0
    // Predicated region
    $region2: #{tpu_custom_call.1} parent=1 // pred_check
      _
    $region3: #{tpu_custom_call.1} parent=1 // pred_check_branch
      %15 = sbr.rel (0) target = $region5
    $region4: #{tpu_custom_call.1} parent=1 // pred_region
      %17 = vsyncadd [#allocation3], 0
      %s19 = sshll.u32 %s0, 4
      %s20 = int_to_ptr.hbm [resolvable:$true] %s19
      %s21 = sshll.u32 [#allocation2], 4
      %s22 = int_to_ptr.vmem [resolvable:$true] %s21
      %24 = dma.hbm_to_vmem [thread:$0]  %s20, 128, %s22, [#allocation3]
    $region5: #{tpu_custom_call.1} parent=1 // pred_fallthru
      _
    // Predicated region
    $region6: #{tpu_custom_call.1} parent=1 // pred_check
      _
    $region7: #{tpu_custom_call.1} parent=1 // pred_check_branch
      %26 = sbr.rel (0) target = $region9
    $region8: #{tpu_custom_call.1} parent=1 // pred_region
      _
    $region9: #{tpu_custom_call.1} parent=1 // pred_fallthru
      _
    // Predicated region
    $region10: #{tpu_custom_call.1} parent=1 // pred_check
      _
    $region11: #{tpu_custom_call.1} parent=1 // pred_check_branch
      %28 = sbr.rel (0) target = $region13
    $region12: #{tpu_custom_call.1} parent=1 // pred_region
      _
    $region13: #{tpu_custom_call.1} parent=1 // pred_fallthru
      _
    // Predicated region
    $region14: #{tpu_custom_call.1} parent=1 // pred_check
      _
    $region15: #{tpu_custom_call.1} parent=1 // pred_check_branch
      %30 = sbr.rel (0) target = $region17
    $region16: #{tpu_custom_call.1} parent=1 // pred_region
      _
    $region17: #{tpu_custom_call.1} parent=1 // pred_fallthru
      _
    // Predicated region
    $region18: #{tpu_custom_call.1} parent=1 // pred_check
      _
    $region19: #{tpu_custom_call.1} parent=1 // pred_check_branch
      %32 = sbr.rel (0) target = $region21
    $region20: #{tpu_custom_call.1} parent=1 // pred_region
      _
    $region21: #{tpu_custom_call.1} parent=1 // pred_fallthru
      _
    // Predicated region
    $region22: #{tpu_custom_call.1} parent=1 // pred_check
      _
    $region23: #{tpu_custom_call.1} parent=1 // pred_check_branch
      %34 = sbr.rel (0) target = $region25
    $region24: #{tpu_custom_call.1} parent=1 // pred_region
      _
    $region25: #{tpu_custom_call.1} parent=1 // pred_fallthru
      _
    // Predicated region
    $region26: #{tpu_custom_call.1} parent=1 // pred_check
      _
    $region27: #{tpu_custom_call.1} parent=1 // pred_check_branch
      %36 = sbr.rel (0) target = $region29
    $region28: #{tpu_custom_call.1} parent=1 // pred_region
      _
    $region29: #{tpu_custom_call.1} parent=1 // pred_fallthru
      _
    // Predicated region
    $region30: #{tpu_custom_call.1} parent=1 // pred_check
      _
    $region31: #{tpu_custom_call.1} parent=1 // pred_check_branch
      %38 = sbr.rel (0) target = $region33
    $region32: #{tpu_custom_call.1} parent=1 // pred_region
      %40 = dma.done [#allocation3], 128
    $region33: #{tpu_custom_call.1} parent=1 // pred_fallthru
      _
    %v42 = vld [vmem:[#allocation2] sm:$0xff]
    %v43 = vpack.c.bf16 %v42, %v42
    %v44 = vld [vmem:[%s1] sm:$0xf]
    %v45 = vld [vmem:[%s1 + $0x4] sm:$0xf]
    %v46 = vld [vmem:[%s1 + $0x8] sm:$0xf]
    %v47 = vld [vmem:[%s1 + $0xc] sm:$0xf]
    %v48 = vld [vmem:[%s2] sm:$0x1]
    %v50 = vperm.slane %v48, 0
    %v56 = vunpack.c.l.b16 %v44
    %v57 = vunpack.c.l.b16 %v45
    %v58 = vunpack.c.l.b16 %v46
    %v59 = vunpack.c.l.b16 %v47
    %v60 = vpack.c.b16 %v57, %v56
    %v61 = vpack.c.b16 %v59, %v58
    %vm64 = vcmask 261120
    %v66 = vsel %vm64, %v43, 0
    %68 = vmatpush.bf16.msra.mxu0 0
    %69 = vmatpush.bf16.msra.mxu0 0
    %70 = vmatpush.bf16.msra.mxu0 0
    %71 = vmatpush.bf16.msra.mxu0 0
    %72 = vmatpush.bf16.msra.mxu0 0
    %73 = vmatpush.bf16.msra.mxu0 0
    %74 = vmatpush.bf16.msra.mxu0 %v61
    %75 = vmatpush.bf16.msra.mxu0 %v60
    %76 = vmatmul.bf16.gmra.mxu0 %v66
    %v77 = vpop.f32.mrf.mxu0
    %v78 = vadd.f32 %v50, %v77
    %v79 = vpop.f32.mrf.mxu0
    %80 = vdwg.mxu0
    %v81 = vmax.f32 %v78, 0.0
    %v82 = vpack.c.bf16 %v81, %v81
    %v83 = vld [vmem:[%s3] sm:$0xf]
    %v84 = vld [vmem:[%s3 + $0x4] sm:$0xf]
    %v85 = vld [vmem:[%s3 + $0x8] sm:$0xf]
    %v86 = vld [vmem:[%s3 + $0xc] sm:$0xf]
    %v87 = vld [vmem:[%s3 + $0x10] sm:$0xf]
    %v88 = vld [vmem:[%s3 + $0x14] sm:$0xf]
    %v89 = vld [vmem:[%s3 + $0x18] sm:$0xf]
    %v90 = vld [vmem:[%s3 + $0x1c] sm:$0xf]
    %v91 = vld [vmem:[%s3 + $0x20] sm:$0xf]
    %v92 = vld [vmem:[%s3 + $0x24] sm:$0xf]
    %v93 = vld [vmem:[%s3 + $0x28] sm:$0xf]
    %v94 = vld [vmem:[%s3 + $0x2c] sm:$0xf]
    %v95 = vld [vmem:[%s3 + $0x30] sm:$0xf]
    %v96 = vld [vmem:[%s3 + $0x34] sm:$0xf]
    %v97 = vld [vmem:[%s3 + $0x38] sm:$0xf]
    %v98 = vld [vmem:[%s3 + $0x3c] sm:$0xf]
    %v99 = vld [vmem:[%s4] sm:$0x1]
    %v101 = vperm.slane %v99, 0
    %v119 = vunpack.c.l.b16 %v83
    %v120 = vunpack.c.l.b16 %v84
    %v121 = vunpack.c.l.b16 %v85
    %v122 = vunpack.c.l.b16 %v86
    %v123 = vunpack.c.l.b16 %v87
    %v124 = vunpack.c.l.b16 %v88
    %v125 = vunpack.c.l.b16 %v89
    %v126 = vunpack.c.l.b16 %v90
    %v127 = vunpack.c.l.b16 %v91
    %v128 = vunpack.c.l.b16 %v92
    %v129 = vunpack.c.l.b16 %v93
    %v130 = vunpack.c.l.b16 %v94
    %v131 = vunpack.c.l.b16 %v95
    %v132 = vunpack.c.l.b16 %v96
    %v133 = vunpack.c.l.b16 %v97
    %v134 = vunpack.c.l.b16 %v98
    %v135 = vpack.c.b16 %v120, %v119
    %v136 = vpack.c.b16 %v122, %v121
    %v137 = vpack.c.b16 %v124, %v123
    %v138 = vpack.c.b16 %v126, %v125
    %v139 = vpack.c.b16 %v128, %v127
    %v140 = vpack.c.b16 %v130, %v129
    %v141 = vpack.c.b16 %v132, %v131
    %v142 = vpack.c.b16 %v134, %v133
    %151 = vmatpush.bf16.msra.mxu0 %v142
    %152 = vmatpush.bf16.msra.mxu0 %v141
    %153 = vmatpush.bf16.msra.mxu0 %v140
    %154 = vmatpush.bf16.msra.mxu0 %v139
    %155 = vmatpush.bf16.msra.mxu0 %v138
    %156 = vmatpush.bf16.msra.mxu0 %v137
    %157 = vmatpush.bf16.msra.mxu0 %v136
    %158 = vmatpush.bf16.msra.mxu0 %v135
    %159 = vmatmul.bf16.gmra.mxu0 %v82
    %v160 = vpop.f32.mrf.mxu0
    %v161 = vadd.f32 %v101, %v160
    %v162 = vpop.f32.mrf.mxu0
    %163 = vdwg.mxu0
    %v164 = vmax.f32 %v161, 0.0
    %v165 = vpack.c.bf16 %v164, %v164
    %v166 = vld [vmem:[%s5] sm:$0xf]
    %v167 = vld [vmem:[%s5 + $0x4] sm:$0xf]
    %v168 = vld [vmem:[%s5 + $0x8] sm:$0xf]
    %v169 = vld [vmem:[%s5 + $0xc] sm:$0xf]
    %v170 = vld [vmem:[%s5 + $0x10] sm:$0xf]
    %v171 = vld [vmem:[%s5 + $0x14] sm:$0xf]
    %v172 = vld [vmem:[%s5 + $0x18] sm:$0xf]
    %v173 = vld [vmem:[%s5 + $0x1c] sm:$0xf]
    %v174 = vld [vmem:[%s5 + $0x20] sm:$0xf]
    %v175 = vld [vmem:[%s5 + $0x24] sm:$0xf]
    %v176 = vld [vmem:[%s5 + $0x28] sm:$0xf]
    %v177 = vld [vmem:[%s5 + $0x2c] sm:$0xf]
    %v178 = vld [vmem:[%s5 + $0x30] sm:$0xf]
    %v179 = vld [vmem:[%s5 + $0x34] sm:$0xf]
    %v180 = vld [vmem:[%s5 + $0x38] sm:$0xf]
    %v181 = vld [vmem:[%s5 + $0x3c] sm:$0xf]
    %v182 = vld [vmem:[%s6] sm:$0x1]
    %v184 = vperm.slane %v182, 0
    %v202 = vunpack.c.l.b16 %v166
    %v203 = vunpack.c.l.b16 %v167
    %v204 = vunpack.c.l.b16 %v168
    %v205 = vunpack.c.l.b16 %v169
    %v206 = vunpack.c.l.b16 %v170
    %v207 = vunpack.c.l.b16 %v171
    %v208 = vunpack.c.l.b16 %v172
    %v209 = vunpack.c.l.b16 %v173
    %v210 = vunpack.c.l.b16 %v174
    %v211 = vunpack.c.l.b16 %v175
    %v212 = vunpack.c.l.b16 %v176
    %v213 = vunpack.c.l.b16 %v177
    %v214 = vunpack.c.l.b16 %v178
    %v215 = vunpack.c.l.b16 %v179
    %v216 = vunpack.c.l.b16 %v180
    %v217 = vunpack.c.l.b16 %v181
    %v218 = vpack.c.b16 %v203, %v202
    %v219 = vpack.c.b16 %v205, %v204
    %v220 = vpack.c.b16 %v207, %v206
    %v221 = vpack.c.b16 %v209, %v208
    %v222 = vpack.c.b16 %v211, %v210
    %v223 = vpack.c.b16 %v213, %v212
    %v224 = vpack.c.b16 %v215, %v214
    %v225 = vpack.c.b16 %v217, %v216
    %234 = vmatpush.bf16.msra.mxu0 %v225
    %235 = vmatpush.bf16.msra.mxu0 %v224
    %236 = vmatpush.bf16.msra.mxu0 %v223
    %237 = vmatpush.bf16.msra.mxu0 %v222
    %238 = vmatpush.bf16.msra.mxu0 %v221
    %239 = vmatpush.bf16.msra.mxu0 %v220
    %240 = vmatpush.bf16.msra.mxu0 %v219
    %241 = vmatpush.bf16.msra.mxu0 %v218
    %242 = vmatmul.bf16.gmra.mxu0 %v165
    %v243 = vpop.f32.mrf.mxu0
    %v244 = vadd.f32 %v184, %v243
    %v245 = vpop.f32.mrf.mxu0
    %246 = vdwg.mxu0
    %247 = vst.msk [vmem:[#allocation5] sm:$0xff] %vm64, %v244
    // Predicated region
    $region34: #{tpu_custom_call.1} parent=1 // pred_check
      _
    $region35: #{tpu_custom_call.1} parent=1 // pred_check_branch
      %249 = sbr.rel (0) target = $region37
    $region36: #{tpu_custom_call.1} parent=1 // pred_region
      %251 = vsyncadd [#allocation4], 0
      %s253 = sshll.u32 [#allocation5], 4
      %s254 = int_to_ptr.vmem [resolvable:$true] %s253
      %s255 = sshll.u32 %s7, 4
      %s256 = int_to_ptr.hbm [resolvable:$true] %s255
      %258 = dma.vmem_to_hbm [thread:$0]  %s254, 128, %s256, [#allocation4]
    $region37: #{tpu_custom_call.1} parent=1 // pred_fallthru
      _
    // Predicated region
    $region38: #{tpu_custom_call.1} parent=1 // pred_check
      _
    $region39: #{tpu_custom_call.1} parent=1 // pred_check_branch
      %260 = sbr.rel (0) target = $region41
    $region40: #{tpu_custom_call.1} parent=1 // pred_region
      %262 = dma.done [#allocation4], 128
    $region41: #{tpu_custom_call.1} parent=1 // pred_fallthru
      _
    %263 = vsyncpa [#allocation3], 1
    %264 = vsyncpa [#allocation4], 1

</llo_original>
